<compile_context>
chip_gen: v7x
topology: tpu7x:2x2x1
jax: 0.10.0
libtpu: 0.0.40
codegen_flags: <defaults>
</compile_context>

<pallas_src>
import functools

import jax
import jax.numpy as jnp
from jax.experimental import pallas as pl
from jax.experimental.pallas import tpu as pltpu

C_IN = 10      # actor input channels
HID = 32       # actor hidden channels
N_DIG = 9      # actor output channels == digits
N_CELL = 81    # board cells (9x9)
MAX_TB = 16    # boards per grid step (16*81 = 1296 rows, a multiple of 8)


def _fused_actor_softmax_kernel(x_ref, w1_ref, b1_ref, w2_ref, b2_ref,
                                g_ref, gt_ref, o_ref, *, tile_b, batch):
    rows = tile_b * N_CELL

    # ---- actor: per-pixel MLP (two 1x1 convs) as one 2-D matmul chain ----
    x = x_ref[...].astype(jnp.float32)                                    # (rows, C_IN)
    h = jnp.dot(x, w1_ref[...], preferred_element_type=jnp.float32) + b1_ref[...]
    h = jnp.maximum(h, 0.0)                                               # f32 epilogue
    l = jnp.dot(h, w2_ref[...], preferred_element_type=jnp.float32) + b2_ref[...]
    # l: (rows, N_DIG); row = board*81 + cell, col = digit.

    # Mask rows past the real batch (ragged final grid step reads padding).
    row0 = pl.program_id(0) * rows
    rid = jax.lax.broadcasted_iota(jnp.int32, (rows, N_DIG), 0) + row0
    valid = rid < batch * N_CELL

    # ---- softmax over the 81 cells of each board, per digit (dim=1) ----
    # Stabilizer: per-digit max over the whole tile.  It is constant within
    # every (board, digit) group, so it cancels exactly in the softmax ratio.
    m = jnp.max(jnp.where(valid, l, -jnp.inf), axis=0, keepdims=True)     # (1, N_DIG)
    e = jnp.where(valid, jnp.exp(l - m), 0.0)                             # (rows, N_DIG)

    # Grouped reductions via tiny 0/1 matmuls (no in-kernel reshape needed):
    #   s[t, d]   = sum over the 81 cells of board t of e        (G  @ e)
    #   r[row, d] = 1 / s[board(row), d]                         (G^T @ 1/s)
    s = jnp.dot(g_ref[...], e, preferred_element_type=jnp.float32)        # (tile_b, N_DIG)
    s = jnp.maximum(s, 1e-30)            # padded boards sum to 0; keep finite
    r = jnp.dot(gt_ref[...], pl.reciprocal(s, approx=False),
                preferred_element_type=jnp.float32)                       # (rows, N_DIG)
    o_ref[...] = e * r


def softmax_wrapper_forward(obs, params, original_image=None):
    """Pallas equivalent of SoftMaxWrapper.forward.

    obs:    (B, 9, 9, C_IN) channels-last Sudoku observation.
    params: (w1, b1, w2, b2) of the synthetic two-layer 1x1-conv actor.
    """
    # TODO(synk): the `original_image` action-mask branch needs
    # agent.get_action_mask (external, data-dependent); only the default
    # (original_image is None) path is implemented.
    del original_image
    w1, b1, w2, b2 = params
    B = obs.shape[0]
    # Free, layout-preserving reshape; the dtype cast happens inside the kernel.
    x2d = obs.reshape(B * N_CELL, C_IN)

    # Boards per grid step: tile_b*81 is either the full row count (B <= 16)
    # or a multiple of 8, satisfying the (8, 128)-or-full block constraint.
    tile_b = B if B <= MAX_TB else MAX_TB
    rows = tile_b * N_CELL
    n_tiles = pl.cdiv(B, tile_b)

    # 0/1 board-membership matrices for the grouped softmax reductions.
    board_of_row = jnp.arange(rows, dtype=jnp.int32) // N_CELL            # (rows,)
    g = (jnp.arange(tile_b, dtype=jnp.int32)[:, None]
         == board_of_row[None, :]).astype(jnp.float32)                    # (tile_b, rows)
    gt = g.T                                                              # (rows, tile_b)

    flops = 2 * B * N_CELL * (C_IN * HID + HID * N_DIG + 2 * N_DIG * tile_b)
    bytes_accessed = 4 * (B * N_CELL * (C_IN + N_DIG)
                          + C_IN * HID + HID + HID * N_DIG + N_DIG
                          + 2 * tile_b * rows)

    kernel = functools.partial(_fused_actor_softmax_kernel,
                               tile_b=tile_b, batch=B)

    probs = pl.pallas_call(
        kernel,
        out_shape=jax.ShapeDtypeStruct((B * N_CELL, N_DIG), jnp.float32),
        grid=(n_tiles,),
        in_specs=[
            pl.BlockSpec((rows, C_IN), lambda i: (i, 0)),     # activations: tiled over boards
            pl.BlockSpec((C_IN, HID), lambda i: (0, 0)),      # weights / biases: VMEM-resident
            pl.BlockSpec((1, HID), lambda i: (0, 0)),
            pl.BlockSpec((HID, N_DIG), lambda i: (0, 0)),
            pl.BlockSpec((1, N_DIG), lambda i: (0, 0)),
            pl.BlockSpec((tile_b, rows), lambda i: (0, 0)),   # G
            pl.BlockSpec((rows, tile_b), lambda i: (0, 0)),   # G^T
        ],
        out_specs=pl.BlockSpec((rows, N_DIG), lambda i: (i, 0)),
        compiler_params=pltpu.CompilerParams(
            dimension_semantics=("parallel",)),
        cost_estimate=pl.CostEstimate(
            flops=flops,
            transcendentals=B * N_CELL * N_DIG,
            bytes_accessed=bytes_accessed),
    )(x2d, w1, b1, w2, b2, g, gt)

    # Free reshape: row b*81+cell, col d  ->  (B, cell*9 + d) == PyTorch layout.
    return probs.reshape(-1, 9 ** 3)


# ----------------------------- reference ---------------------------------- #

def _ref_forward(obs, params):
    w1, b1, w2, b2 = params
    x = obs.reshape(-1, C_IN).astype(jnp.float32)
    h = jnp.maximum(x @ w1 + b1, 0.0)
    l = (h @ w2 + b2).reshape(-1, N_CELL, N_DIG)
    return jax.nn.softmax(l, axis=1).reshape(-1, 9 ** 3)


# ------------------------------- main -------------------------------------- #

if __name__ == "__main__":
    key = jax.random.PRNGKey(0)
    k1, k2, k3, k4, k5 = jax.random.split(key, 5)

    # Deterministic synthetic actor parameters (two 1x1 convs).
    w1 = 0.1 * jax.random.normal(k1, (C_IN, HID), jnp.float32)
    b1 = 0.01 * jax.random.normal(k2, (1, HID), jnp.float32)
    w2 = 0.1 * jax.random.normal(k3, (HID, N_DIG), jnp.float32)
    b2 = 0.01 * jax.random.normal(k4, (1, N_DIG), jnp.float32)
    params = (w1, b1, w2, b2)

    # Small batch: single grid step (block == full array dims).
    obs = jax.random.normal(k5, (2, 9, 9, C_IN), jnp.float32)
    out = jax.block_until_ready(softmax_wrapper_forward(obs, params))
    ref = _ref_forward(obs, params)
    assert out.shape == (2, 729)
    assert jnp.allclose(out, ref, atol=1e-5, rtol=1e-5)

    # Larger batch: exercises the tiled grid (3 steps x 16 boards).
    obs_big = jax.random.normal(k5, (48, 9, 9, C_IN), jnp.float32)
    out_big = jax.block_until_ready(softmax_wrapper_forward(obs_big, params))
    ref_big = _ref_forward(obs_big, params)
    assert out_big.shape == (48, 729)
    assert jnp.allclose(out_big, ref_big, atol=1e-5, rtol=1e-5)

    print("KERNEL_OK")
</pallas_src>

<mosaic_0001>
module attributes {stable_mosaic.version = 11 : i64} {
  func.func @_fused_actor_softmax_kernel(%arg0: i32, %arg1: memref<162x10xf32, #tpu.memory_space<vmem>>, %arg2: memref<10x32xf32, #tpu.memory_space<vmem>>, %arg3: memref<1x32xf32, #tpu.memory_space<vmem>>, %arg4: memref<32x9xf32, #tpu.memory_space<vmem>>, %arg5: memref<1x9xf32, #tpu.memory_space<vmem>>, %arg6: memref<2x162xf32, #tpu.memory_space<vmem>>, %arg7: memref<162x2xf32, #tpu.memory_space<vmem>>, %arg8: memref<162x9xf32, #tpu.memory_space<vmem>>) attributes {dimension_semantics = [#tpu.dimension_semantics<parallel>], iteration_bounds = array<i64: 1>, scalar_prefetch = 0 : i64, scratch_operands = 0 : i64, tpu.core_type = #tpu.core_type<tc>, window_params = [{transform_indices = @transform_0, window_bounds = array<i64: 162, 10>}, {pipeline_mode = #tpu.pipeline_mode<synchronous>, transform_indices = @transform_1, window_bounds = array<i64: 10, 32>}, {pipeline_mode = #tpu.pipeline_mode<synchronous>, transform_indices = @transform_2, window_bounds = array<i64: 1, 32>}, {pipeline_mode = #tpu.pipeline_mode<synchronous>, transform_indices = @transform_3, window_bounds = array<i64: 32, 9>}, {pipeline_mode = #tpu.pipeline_mode<synchronous>, transform_indices = @transform_4, window_bounds = array<i64: 1, 9>}, {pipeline_mode = #tpu.pipeline_mode<synchronous>, transform_indices = @transform_5, window_bounds = array<i64: 2, 162>}, {pipeline_mode = #tpu.pipeline_mode<synchronous>, transform_indices = @transform_6, window_bounds = array<i64: 162, 2>}, {transform_indices = @transform_7, window_bounds = array<i64: 162, 9>}]} {
    %c0 = arith.constant 0 : index
    %c0_0 = arith.constant 0 : index
    %0 = vector.load %arg1[%c0, %c0_0] : memref<162x10xf32, #tpu.memory_space<vmem>>, vector<162x10xf32>
    %c0_1 = arith.constant 0 : index
    %c0_2 = arith.constant 0 : index
    %1 = vector.load %arg2[%c0_1, %c0_2] : memref<10x32xf32, #tpu.memory_space<vmem>>, vector<10x32xf32>
    %cst = arith.constant dense<0.000000e+00> : vector<162x32xf32>
    %2 = tpu.matmul %0, %1, %cst {dimension_numbers = #tpu.dot_dimension_numbers<[1], [0], [0], [1], [0, 0, 1, 1], [], []>} : vector<162x10xf32>, vector<10x32xf32>, vector<162x32xf32> -> vector<162x32xf32>
    %c0_3 = arith.constant 0 : index
    %c0_4 = arith.constant 0 : index
    %3 = vector.load %arg3[%c0_3, %c0_4] : memref<1x32xf32, #tpu.memory_space<vmem>>, vector<1x32xf32>
    %4 = vector.broadcast %3 : vector<1x32xf32> to vector<162x32xf32>
    %5 = arith.addf %2, %4 : vector<162x32xf32>
    %cst_5 = arith.constant 0.000000e+00 : f32
    %6 = vector.broadcast %cst_5 : f32 to vector<162x32xf32>
    %7 = arith.maximumf %5, %6 : vector<162x32xf32>
    %c0_6 = arith.constant 0 : index
    %c0_7 = arith.constant 0 : index
    %8 = vector.load %arg4[%c0_6, %c0_7] : memref<32x9xf32, #tpu.memory_space<vmem>>, vector<32x9xf32>
    %cst_8 = arith.constant dense<0.000000e+00> : vector<162x9xf32>
    %9 = tpu.matmul %7, %8, %cst_8 {dimension_numbers = #tpu.dot_dimension_numbers<[1], [0], [0], [1], [0, 0, 1, 1], [], []>} : vector<162x32xf32>, vector<32x9xf32>, vector<162x9xf32> -> vector<162x9xf32>
    %c0_9 = arith.constant 0 : index
    %c0_10 = arith.constant 0 : index
    %10 = vector.load %arg5[%c0_9, %c0_10] : memref<1x9xf32, #tpu.memory_space<vmem>>, vector<1x9xf32>
    %11 = vector.broadcast %10 : vector<1x9xf32> to vector<162x9xf32>
    %12 = arith.addf %9, %11 : vector<162x9xf32>
    %c162_i32 = arith.constant 162 : i32
    %13 = arith.muli %arg0, %c162_i32 : i32
    %14 = tpu.iota {dimensions = array<i32: 0>} : vector<162x9xi32>
    %15 = vector.broadcast %13 : i32 to vector<162x9xi32>
    %16 = arith.addi %14, %15 : vector<162x9xi32>
    %c162_i32_11 = arith.constant 162 : i32
    %17 = vector.broadcast %c162_i32_11 : i32 to vector<162x9xi32>
    %18 = arith.cmpi slt, %16, %17 : vector<162x9xi32>
    %cst_12 = arith.constant 0xFF800000 : f32
    %19 = vector.broadcast %cst_12 : f32 to vector<162x9xf32>
    %20 = arith.select %18, %12, %19 : vector<162x9xi1>, vector<162x9xf32>
    %cst_13 = arith.constant dense<0xFF800000> : vector<9xf32>
    %21 = vector.multi_reduction <maximumf>, %20, %cst_13 [0] : vector<162x9xf32> to vector<9xf32>
    %22 = vector.shape_cast %21 : vector<9xf32> to vector<1x9xf32>
    %23 = vector.broadcast %22 : vector<1x9xf32> to vector<162x9xf32>
    %24 = arith.subf %12, %23 : vector<162x9xf32>
    %25 = math.exp %24 : vector<162x9xf32>
    %cst_14 = arith.constant 0.000000e+00 : f32
    %26 = vector.broadcast %cst_14 : f32 to vector<162x9xf32>
    %27 = arith.select %18, %25, %26 : vector<162x9xi1>, vector<162x9xf32>
    %c0_15 = arith.constant 0 : index
    %c0_16 = arith.constant 0 : index
    %28 = vector.load %arg6[%c0_15, %c0_16] : memref<2x162xf32, #tpu.memory_space<vmem>>, vector<2x162xf32>
    %cst_17 = arith.constant dense<0.000000e+00> : vector<2x9xf32>
    %29 = tpu.matmul %28, %27, %cst_17 {dimension_numbers = #tpu.dot_dimension_numbers<[1], [0], [0], [1], [0, 0, 1, 1], [], []>} : vector<2x162xf32>, vector<162x9xf32>, vector<2x9xf32> -> vector<2x9xf32>
    %cst_18 = arith.constant 1.000000e-30 : f32
    %30 = vector.broadcast %cst_18 : f32 to vector<2x9xf32>
    %31 = arith.maximumf %29, %30 : vector<2x9xf32>
    %c0_19 = arith.constant 0 : index
    %c0_20 = arith.constant 0 : index
    %32 = vector.load %arg7[%c0_19, %c0_20] : memref<162x2xf32, #tpu.memory_space<vmem>>, vector<162x2xf32>
    %33 = tpu.reciprocal %31 : vector<2x9xf32> -> vector<2x9xf32>
    %cst_21 = arith.constant dense<0.000000e+00> : vector<162x9xf32>
    %34 = tpu.matmul %32, %33, %cst_21 {dimension_numbers = #tpu.dot_dimension_numbers<[1], [0], [0], [1], [0, 0, 1, 1], [], []>} : vector<162x2xf32>, vector<2x9xf32>, vector<162x9xf32> -> vector<162x9xf32>
    %35 = arith.mulf %27, %34 : vector<162x9xf32>
    %c0_22 = arith.constant 0 : index
    %c0_23 = arith.constant 0 : index
    %36 = vector.load %arg8[%c0_22, %c0_23] : memref<162x9xf32, #tpu.memory_space<vmem>>, vector<162x9xf32>
    tpu.vector_store %arg8[%c0_22, %c0_23], %35 {strides = array<i32>} : memref<162x9xf32, #tpu.memory_space<vmem>>, vector<162x9xf32>,
    return
  }
  func.func @transform_0(%arg0: i32) -> (i32, i32) {
    %c0_i32 = arith.constant 0 : i32
    %c0_i32_0 = arith.constant 0 : i32
    return %arg0, %c0_i32 : i32, i32
  }
  func.func @transform_1(%arg0: i32) -> (i32, i32) {
    %c0_i32 = arith.constant 0 : i32
    %c0_i32_0 = arith.constant 0 : i32
    %c0_i32_1 = arith.constant 0 : i32
    return %c0_i32, %c0_i32_0 : i32, i32
  }
  func.func @transform_2(%arg0: i32) -> (i32, i32) {
    %c0_i32 = arith.constant 0 : i32
    %c0_i32_0 = arith.constant 0 : i32
    %c0_i32_1 = arith.constant 0 : i32
    return %c0_i32, %c0_i32_0 : i32, i32
  }
  func.func @transform_3(%arg0: i32) -> (i32, i32) {
    %c0_i32 = arith.constant 0 : i32
    %c0_i32_0 = arith.constant 0 : i32
    %c0_i32_1 = arith.constant 0 : i32
    return %c0_i32, %c0_i32_0 : i32, i32
  }
  func.func @transform_4(%arg0: i32) -> (i32, i32) {
    %c0_i32 = arith.constant 0 : i32
    %c0_i32_0 = arith.constant 0 : i32
    %c0_i32_1 = arith.constant 0 : i32
    return %c0_i32, %c0_i32_0 : i32, i32
  }
  func.func @transform_5(%arg0: i32) -> (i32, i32) {
    %c0_i32 = arith.constant 0 : i32
    %c0_i32_0 = arith.constant 0 : i32
    %c0_i32_1 = arith.constant 0 : i32
    return %c0_i32, %c0_i32_0 : i32, i32
  }
  func.func @transform_6(%arg0: i32) -> (i32, i32) {
    %c0_i32 = arith.constant 0 : i32
    %c0_i32_0 = arith.constant 0 : i32
    %c0_i32_1 = arith.constant 0 : i32
    return %c0_i32, %c0_i32_0 : i32, i32
  }
  func.func @transform_7(%arg0: i32) -> (i32, i32) {
    %c0_i32 = arith.constant 0 : i32
    %c0_i32_0 = arith.constant 0 : i32
    return %arg0, %c0_i32 : i32, i32
  }
}

</mosaic_0001>

<llo_original>
// kernel: tpu_custom_call.1
$region0: #{tpu_custom_call.1}
  #allocation0 [shape = 'u32[]', space=smem, size = 0x4, offset = 0x4, fixed_abs, tag = 'smem constant byte address 0x4 - core index']
  #allocation1 [shape = 'u32[144,128]{1,0:T(1,128)}', space=vmem, size = 0x12000, scoped, tag = 'internal scratch']
  %s0 = inlined_call_operand.vmem [shape: f32[162,10], index: 0, kind: input, shape index: {}]
  %s1 = inlined_call_operand.vmem [shape: f32[10,32], index: 1, kind: input, shape index: {}]
  %s2 = inlined_call_operand.vmem [shape: f32[1,32], index: 2, kind: input, shape index: {}]
  %s3 = inlined_call_operand.vmem [shape: f32[32,9], index: 3, kind: input, shape index: {}]
  %s4 = inlined_call_operand.vmem [shape: f32[1,9], index: 4, kind: input, shape index: {}]
  %s5 = inlined_call_operand.vmem [shape: f32[2,162], index: 5, kind: input, shape index: {}]
  %s6 = inlined_call_operand.vmem [shape: f32[162,2], index: 6, kind: input, shape index: {}]
  %s7 = inlined_call_operand.vmem [shape: f32[162,9], index: 7, kind: output, shape index: {}]
  %s8 = sld [smem:[#allocation0]]
  $region38: #{tpu_custom_call.1} parent=0
    _
  %s10 = ssub.s32 1, %s8
  %s11 = scalar_select 0, %s10, %s8
  // Predicated region
  $region2: #{tpu_custom_call.1} parent=0 // pred_check
    _
  $region3: #{tpu_custom_call.1} parent=0 // pred_check_branch
    %13 = sbr.rel (0) target = $region5
  $region4: #{tpu_custom_call.1} parent=0 // pred_region
    _
  $region5: #{tpu_custom_call.1} parent=0 // pred_fallthru
    _
  // Predicated region
  $region6: #{tpu_custom_call.1} parent=0 // pred_check
    _
  $region7: #{tpu_custom_call.1} parent=0 // pred_check_branch
    %15 = sbr.rel (0) target = $region9
  $region8: #{tpu_custom_call.1} parent=0 // pred_region
    _
  $region9: #{tpu_custom_call.1} parent=0 // pred_fallthru
    _
  // Predicated region
  $region10: #{tpu_custom_call.1} parent=0 // pred_check
    _
  $region11: #{tpu_custom_call.1} parent=0 // pred_check_branch
    %17 = sbr.rel (0) target = $region13
  $region12: #{tpu_custom_call.1} parent=0 // pred_region
    _
  $region13: #{tpu_custom_call.1} parent=0 // pred_fallthru
    _
  // Predicated region
  $region14: #{tpu_custom_call.1} parent=0 // pred_check
    _
  $region15: #{tpu_custom_call.1} parent=0 // pred_check_branch
    %19 = sbr.rel (0) target = $region17
  $region16: #{tpu_custom_call.1} parent=0 // pred_region
    _
  $region17: #{tpu_custom_call.1} parent=0 // pred_fallthru
    _
  // Predicated region
  $region18: #{tpu_custom_call.1} parent=0 // pred_check
    _
  $region19: #{tpu_custom_call.1} parent=0 // pred_check_branch
    %21 = sbr.rel (0) target = $region21
  $region20: #{tpu_custom_call.1} parent=0 // pred_region
    _
  $region21: #{tpu_custom_call.1} parent=0 // pred_fallthru
    _
  // Predicated region
  $region22: #{tpu_custom_call.1} parent=0 // pred_check
    _
  $region23: #{tpu_custom_call.1} parent=0 // pred_check_branch
    %23 = sbr.rel (0) target = $region25
  $region24: #{tpu_custom_call.1} parent=0 // pred_region
    _
  $region25: #{tpu_custom_call.1} parent=0 // pred_fallthru
    _
  // Predicated region
  $region26: #{tpu_custom_call.1} parent=0 // pred_check
    _
  $region27: #{tpu_custom_call.1} parent=0 // pred_check_branch
    %25 = sbr.rel (0) target = $region29
  $region28: #{tpu_custom_call.1} parent=0 // pred_region
    _
  $region29: #{tpu_custom_call.1} parent=0 // pred_fallthru
    _
  %v26 = vld [vmem:[%s0] sm:$0xff]
  %v27 = vld [vmem:[%s0 + $0x8] sm:$0xff]
  %v28 = vld [vmem:[%s0 + $0x10] sm:$0xff]
  %v29 = vld [vmem:[%s0 + $0x18] sm:$0xff]
  %v30 = vld [vmem:[%s0 + $0x20] sm:$0xff]
  %v31 = vld [vmem:[%s0 + $0x28] sm:$0xff]
  %v32 = vld [vmem:[%s0 + $0x30] sm:$0xff]
  %v33 = vld [vmem:[%s0 + $0x38] sm:$0xff]
  %v34 = vld [vmem:[%s0 + $0x40] sm:$0xff]
  %v35 = vld [vmem:[%s0 + $0x48] sm:$0xff]
  %v36 = vld [vmem:[%s0 + $0x50] sm:$0xff]
  %v37 = vld [vmem:[%s0 + $0x58] sm:$0xff]
  %v38 = vld [vmem:[%s0 + $0x60] sm:$0xff]
  %v39 = vld [vmem:[%s0 + $0x68] sm:$0xff]
  %v40 = vld [vmem:[%s0 + $0x70] sm:$0xff]
  %v41 = vld [vmem:[%s0 + $0x78] sm:$0xff]
  %v42 = vld [vmem:[%s0 + $0x80] sm:$0xff]
  %v43 = vld [vmem:[%s0 + $0x88] sm:$0xff]
  %v44 = vld [vmem:[%s0 + $0x90] sm:$0xff]
  %v45 = vld [vmem:[%s0 + $0x98] sm:$0xff]
  %v46 = vld [vmem:[%s0 + $0xa0] sm:$0x3]
  %v47 = vld [vmem:[%s1] sm:$0xff]
  %v48 = vld [vmem:[%s1 + $0x8] sm:$0x3]
  %v49 = vld [vmem:[%s2] sm:$0x1]
  %v51 = vlaneseq
  %v52 = vshrl.u32 %v51, 7
  %v53 = vsub.s32 0, %v52
  %v54 = vrot.slane %v49, %v53
  %vm56 = vcmask 80896
  %v58 = vsel %vm56, %v26, 0
  %v61 = vsel %vm56, %v27, 0
  %v64 = vsel %vm56, %v28, 0
  %v67 = vsel %vm56, %v29, 0
  %v70 = vsel %vm56, %v30, 0
  %v73 = vsel %vm56, %v31, 0
  %v76 = vsel %vm56, %v32, 0
  %v79 = vsel %vm56, %v33, 0
  %v82 = vsel %vm56, %v34, 0
  %v85 = vsel %vm56, %v35, 0
  %v88 = vsel %vm56, %v36, 0
  %v91 = vsel %vm56, %v37, 0
  %v94 = vsel %vm56, %v38, 0
  %v97 = vsel %vm56, %v39, 0
  %v100 = vsel %vm56, %v40, 0
  %v103 = vsel %vm56, %v41, 0
  %v106 = vsel %vm56, %v42, 0
  %v109 = vsel %vm56, %v43, 0
  %v112 = vsel %vm56, %v44, 0
  %v115 = vsel %vm56, %v45, 0
  %v118 = vsel %vm56, %v46, 0
  %vm120 = vcmask 1041408
  %v122 = vsel %vm120, %v48, 0
  %124 = vmatprep.subr.mxu0 0.0
  %125 = vmatpush1.msra.mxu0 %v47
  %126 = vmatprep.subr.mxu0 0.0
  %127 = vmatpush1.msra.mxu0 %v122
  %128 = vmatprep.subr.mxu0 0.0
  %129 = vmatpush1.msra.mxu0 0.0
  %130 = vmatprep.subr.mxu0 0.0
  %131 = vmatpush1.msra.mxu0 0.0
  %132 = vmatprep.subr.mxu0 0.0
  %133 = vmatpush1.msra.mxu0 0.0
  %134 = vmatprep.subr.mxu0 0.0
  %135 = vmatpush1.msra.mxu0 0.0
  %136 = vmatprep.subr.mxu0 0.0
  %137 = vmatpush1.msra.mxu0 0.0
  %138 = vmatprep.subr.mxu0 0.0
  %139 = vmatpush1.msra.mxu0 0.0
  %140 = vmatprep.subr.mxu0 0.0
  %141 = vmatpush1.msra.mxu0 0.0
  %142 = vmatprep.subr.mxu0 0.0
  %143 = vmatpush1.msra.mxu0 0.0
  %144 = vmatprep.subr.mxu0 0.0
  %145 = vmatpush1.msra.mxu0 0.0
  %146 = vmatprep.subr.mxu0 0.0
  %147 = vmatpush1.msra.mxu0 0.0
  %148 = vmatprep.subr.mxu0 0.0
  %149 = vmatpush1.msra.mxu0 0.0
  %150 = vmatprep.subr.mxu0 0.0
  %151 = vmatpush1.msra.mxu0 0.0
  %152 = vmatprep.subr.mxu0 0.0
  %153 = vmatpush1.msra.mxu0 0.0
  %154 = vmatprep.subr.mxu0 0.0
  %155 = vmatpush1.msra.mxu0 0.0
  %156 = vmatprep.subr.mxu0 0.0
  %157 = vmatpush1.msra.mxu0 0.0
  %158 = vmatprep.subr.mxu0 0.0
  %159 = vmatpush1.msra.mxu0 0.0
  %160 = vmatprep.subr.mxu0 0.0
  %161 = vmatpush1.msra.mxu0 0.0
  %162 = vmatprep.subr.mxu0 0.0
  %163 = vmatpush1.msra.mxu0 0.0
  %164 = vmatprep.subr.mxu0 0.0
  %165 = vmatpush1.msra.mxu0 0.0
  %166 = vmatprep.subr.mxu0 0.0
  %167 = vmatpush1.msra.mxu0 0.0
  %168 = vmatprep.subr.mxu0 0.0
  %169 = vmatpush1.msra.mxu0 0.0
  %170 = vmatprep.subr.mxu0 0.0
  %171 = vmatpush1.msra.mxu0 0.0
  %172 = vmatprep.subr.mxu0 0.0
  %173 = vmatpush1.msra.mxu0 0.0
  %174 = vmatprep.subr.mxu0 0.0
  %175 = vmatpush1.msra.mxu0 0.0
  %176 = vmatprep.subr.mxu0 0.0
  %177 = vmatpush1.msra.mxu0 0.0
  %178 = vmatprep.subr.mxu0 0.0
  %179 = vmatpush1.msra.mxu0 0.0
  %180 = vmatprep.subr.mxu0 0.0
  %181 = vmatpush1.msra.mxu0 0.0
  %182 = vmatprep.subr.mxu0 0.0
  %183 = vmatpush1.msra.mxu0 0.0
  %184 = vmatprep.subr.mxu0 0.0
  %185 = vmatpush1.msra.mxu0 0.0
  %186 = vmatprep.subr.mxu0 0.0
  %187 = vmatpush1.msra.mxu0 0.0
  %188 = vmatprep.mubr.f32.mxu0 0.0
  %189 = vmatmul.mubr.f32.gmra.mrb[0].mxu0 %v58
  %v190 = vpop.f32.mrb[0].mxu0
  %v191 = vadd.f32 %v54, %v190
  %v192 = vpop.f32.mrb[0].mxu0
  %193 = vmatprep.mubr.f32.mxu0 0.0
  %194 = vmatmul.mubr.f32.gmra.mrb[0].mxu0 %v61
  %v195 = vpop.f32.mrb[0].mxu0
  %v196 = vadd.f32 %v54, %v195
  %v197 = vpop.f32.mrb[0].mxu0
  %198 = vmatprep.mubr.f32.mxu0 0.0
  %199 = vmatmul.mubr.f32.gmra.mrb[0].mxu0 %v64
  %v200 = vpop.f32.mrb[0].mxu0
  %v201 = vadd.f32 %v54, %v200
  %v202 = vpop.f32.mrb[0].mxu0
  %203 = vmatprep.mubr.f32.mxu0 0.0
  %204 = vmatmul.mubr.f32.gmra.mrb[0].mxu0 %v67
  %v205 = vpop.f32.mrb[0].mxu0
  %v206 = vadd.f32 %v54, %v205
  %v207 = vpop.f32.mrb[0].mxu0
  %208 = vmatprep.mubr.f32.mxu0 0.0
  %209 = vmatmul.mubr.f32.gmra.mrb[0].mxu0 %v70
  %v210 = vpop.f32.mrb[0].mxu0
  %v211 = vadd.f32 %v54, %v210
  %v212 = vpop.f32.mrb[0].mxu0
  %213 = vmatprep.mubr.f32.mxu0 0.0
  %214 = vmatmul.mubr.f32.gmra.mrb[0].mxu0 %v73
  %v215 = vpop.f32.mrb[0].mxu0
  %v216 = vadd.f32 %v54, %v215
  %v217 = vpop.f32.mrb[0].mxu0
  %218 = vmatprep.mubr.f32.mxu0 0.0
  %219 = vmatmul.mubr.f32.gmra.mrb[0].mxu0 %v76
  %v220 = vpop.f32.mrb[0].mxu0
  %v221 = vadd.f32 %v54, %v220
  %v222 = vpop.f32.mrb[0].mxu0
  %223 = vmatprep.mubr.f32.mxu0 0.0
  %224 = vmatmul.mubr.f32.gmra.mrb[0].mxu0 %v79
  %v225 = vpop.f32.mrb[0].mxu0
  %v226 = vadd.f32 %v54, %v225
  %v227 = vpop.f32.mrb[0].mxu0
  %228 = vmatprep.mubr.f32.mxu0 0.0
  %229 = vmatmul.mubr.f32.gmra.mrb[0].mxu0 %v82
  %v230 = vpop.f32.mrb[0].mxu0
  %v231 = vadd.f32 %v54, %v230
  %v232 = vpop.f32.mrb[0].mxu0
  %233 = vmatprep.mubr.f32.mxu0 0.0
  %234 = vmatmul.mubr.f32.gmra.mrb[0].mxu0 %v85
  %v235 = vpop.f32.mrb[0].mxu0
  %v236 = vadd.f32 %v54, %v235
  %v237 = vpop.f32.mrb[0].mxu0
  %238 = vmatprep.mubr.f32.mxu0 0.0
  %239 = vmatmul.mubr.f32.gmra.mrb[0].mxu0 %v88
  %v240 = vpop.f32.mrb[0].mxu0
  %v241 = vadd.f32 %v54, %v240
  %v242 = vpop.f32.mrb[0].mxu0
  %243 = vmatprep.mubr.f32.mxu0 0.0
  %244 = vmatmul.mubr.f32.gmra.mrb[0].mxu0 %v91
  %v245 = vpop.f32.mrb[0].mxu0
  %v246 = vadd.f32 %v54, %v245
  %v247 = vpop.f32.mrb[0].mxu0
  %248 = vmatprep.mubr.f32.mxu0 0.0
  %249 = vmatmul.mubr.f32.gmra.mrb[0].mxu0 %v94
  %v250 = vpop.f32.mrb[0].mxu0
  %v251 = vadd.f32 %v54, %v250
  %v252 = vpop.f32.mrb[0].mxu0
  %253 = vmatprep.mubr.f32.mxu0 0.0
  %254 = vmatmul.mubr.f32.gmra.mrb[0].mxu0 %v97
  %v255 = vpop.f32.mrb[0].mxu0
  %v256 = vadd.f32 %v54, %v255
  %v257 = vpop.f32.mrb[0].mxu0
  %258 = vmatprep.mubr.f32.mxu0 0.0
  %259 = vmatmul.mubr.f32.gmra.mrb[0].mxu0 %v100
  %v260 = vpop.f32.mrb[0].mxu0
  %v261 = vadd.f32 %v54, %v260
  %v262 = vpop.f32.mrb[0].mxu0
  %263 = vmatprep.mubr.f32.mxu0 0.0
  %264 = vmatmul.mubr.f32.gmra.mrb[0].mxu0 %v103
  %v265 = vpop.f32.mrb[0].mxu0
  %v266 = vadd.f32 %v54, %v265
  %v267 = vpop.f32.mrb[0].mxu0
  %268 = vmatprep.mubr.f32.mxu0 0.0
  %269 = vmatmul.mubr.f32.gmra.mrb[0].mxu0 %v106
  %v270 = vpop.f32.mrb[0].mxu0
  %v271 = vadd.f32 %v54, %v270
  %v272 = vpop.f32.mrb[0].mxu0
  %273 = vmatprep.mubr.f32.mxu0 0.0
  %274 = vmatmul.mubr.f32.gmra.mrb[0].mxu0 %v109
  %v275 = vpop.f32.mrb[0].mxu0
  %v276 = vadd.f32 %v54, %v275
  %v277 = vpop.f32.mrb[0].mxu0
  %278 = vmatprep.mubr.f32.mxu0 0.0
  %279 = vmatmul.mubr.f32.gmra.mrb[0].mxu0 %v112
  %v280 = vpop.f32.mrb[0].mxu0
  %v281 = vadd.f32 %v54, %v280
  %v282 = vpop.f32.mrb[0].mxu0
  %283 = vmatprep.mubr.f32.mxu0 0.0
  %284 = vmatmul.mubr.f32.gmra.mrb[0].mxu0 %v115
  %v285 = vpop.f32.mrb[0].mxu0
  %v286 = vadd.f32 %v54, %v285
  %v287 = vpop.f32.mrb[0].mxu0
  %288 = vmatprep.mubr.f32.mxu0 0.0
  %289 = vmatmul.mubr.f32.gmra.mrb[0].mxu0 %v118
  %v290 = vpop.f32.mrb[0].mxu0
  %v291 = vadd.f32 %v54, %v290
  %v292 = vpop.f32.mrb[0].mxu0
  %293 = vdwg.mxu0
  %v294 = vmax.f32 %v191, 0.0
  %v295 = vmax.f32 %v196, 0.0
  %v296 = vmax.f32 %v201, 0.0
  %v297 = vmax.f32 %v206, 0.0
  %v298 = vmax.f32 %v211, 0.0
  %v299 = vmax.f32 %v216, 0.0
  %v300 = vmax.f32 %v221, 0.0
  %v301 = vmax.f32 %v226, 0.0
  %v302 = vmax.f32 %v231, 0.0
  %v303 = vmax.f32 %v236, 0.0
  %v304 = vmax.f32 %v241, 0.0
  %v305 = vmax.f32 %v246, 0.0
  %v306 = vmax.f32 %v251, 0.0
  %v307 = vmax.f32 %v256, 0.0
  %v308 = vmax.f32 %v261, 0.0
  %v309 = vmax.f32 %v266, 0.0
  %v310 = vmax.f32 %v271, 0.0
  %v311 = vmax.f32 %v276, 0.0
  %v312 = vmax.f32 %v281, 0.0
  %v313 = vmax.f32 %v286, 0.0
  %v314 = vmax.f32 %v291, 0.0
  %v315 = vld [vmem:[%s3] sm:$0xff]
  %v316 = vld [vmem:[%s3 + $0x8] sm:$0xff]
  %v317 = vld [vmem:[%s3 + $0x10] sm:$0xff]
  %v318 = vld [vmem:[%s3 + $0x18] sm:$0xff]
  %v319 = vld [vmem:[%s4] sm:$0x1]
  %v321 = vlaneseq
  %v322 = vshrl.u32 %v321, 7
  %v323 = vsub.s32 0, %v322
  %v324 = vrot.slane %v319, %v323
  %vm326 = vcmask 261120
  %v328 = vsel %vm326, %v294, 0
  %v331 = vsel %vm326, %v295, 0
  %v334 = vsel %vm326, %v296, 0
  %v337 = vsel %vm326, %v297, 0
  %v340 = vsel %vm326, %v298, 0
  %v343 = vsel %vm326, %v299, 0
  %v346 = vsel %vm326, %v300, 0
  %v349 = vsel %vm326, %v301, 0
  %v352 = vsel %vm326, %v302, 0
  %v355 = vsel %vm326, %v303, 0
  %v358 = vsel %vm326, %v304, 0
  %v361 = vsel %vm326, %v305, 0
  %v364 = vsel %vm326, %v306, 0
  %v367 = vsel %vm326, %v307, 0
  %v370 = vsel %vm326, %v308, 0
  %v373 = vsel %vm326, %v309, 0
  %v376 = vsel %vm326, %v310, 0
  %v379 = vsel %vm326, %v311, 0
  %v382 = vsel %vm326, %v312, 0
  %v385 = vsel %vm326, %v313, 0
  %v388 = vsel %vm326, %v314, 0
  %390 = vmatprep.subr.mxu0 0.0
  %391 = vmatpush1.msra.mxu0 %v315
  %392 = vmatprep.subr.mxu0 0.0
  %393 = vmatpush1.msra.mxu0 %v316
  %394 = vmatprep.subr.mxu0 0.0
  %395 = vmatpush1.msra.mxu0 %v317
  %396 = vmatprep.subr.mxu0 0.0
  %397 = vmatpush1.msra.mxu0 %v318
  %398 = vmatprep.subr.mxu0 0.0
  %399 = vmatpush1.msra.mxu0 0.0
  %400 = vmatprep.subr.mxu0 0.0
  %401 = vmatpush1.msra.mxu0 0.0
  %402 = vmatprep.subr.mxu0 0.0
  %403 = vmatpush1.msra.mxu0 0.0
  %404 = vmatprep.subr.mxu0 0.0
  %405 = vmatpush1.msra.mxu0 0.0
  %406 = vmatprep.subr.mxu0 0.0
  %407 = vmatpush1.msra.mxu0 0.0
  %408 = vmatprep.subr.mxu0 0.0
  %409 = vmatpush1.msra.mxu0 0.0
  %410 = vmatprep.subr.mxu0 0.0
  %411 = vmatpush1.msra.mxu0 0.0
  %412 = vmatprep.subr.mxu0 0.0
  %413 = vmatpush1.msra.mxu0 0.0
  %414 = vmatprep.subr.mxu0 0.0
  %415 = vmatpush1.msra.mxu0 0.0
  %416 = vmatprep.subr.mxu0 0.0
  %417 = vmatpush1.msra.mxu0 0.0
  %418 = vmatprep.subr.mxu0 0.0
  %419 = vmatpush1.msra.mxu0 0.0
  %420 = vmatprep.subr.mxu0 0.0
  %421 = vmatpush1.msra.mxu0 0.0
  %422 = vmatprep.subr.mxu0 0.0
  %423 = vmatpush1.msra.mxu0 0.0
  %424 = vmatprep.subr.mxu0 0.0
  %425 = vmatpush1.msra.mxu0 0.0
  %426 = vmatprep.subr.mxu0 0.0
  %427 = vmatpush1.msra.mxu0 0.0
  %428 = vmatprep.subr.mxu0 0.0
  %429 = vmatpush1.msra.mxu0 0.0
  %430 = vmatprep.subr.mxu0 0.0
  %431 = vmatpush1.msra.mxu0 0.0
  %432 = vmatprep.subr.mxu0 0.0
  %433 = vmatpush1.msra.mxu0 0.0
  %434 = vmatprep.subr.mxu0 0.0
  %435 = vmatpush1.msra.mxu0 0.0
  %436 = vmatprep.subr.mxu0 0.0
  %437 = vmatpush1.msra.mxu0 0.0
  %438 = vmatprep.subr.mxu0 0.0
  %439 = vmatpush1.msra.mxu0 0.0
  %440 = vmatprep.subr.mxu0 0.0
  %441 = vmatpush1.msra.mxu0 0.0
  %442 = vmatprep.subr.mxu0 0.0
  %443 = vmatpush1.msra.mxu0 0.0
  %444 = vmatprep.subr.mxu0 0.0
  %445 = vmatpush1.msra.mxu0 0.0
  %446 = vmatprep.subr.mxu0 0.0
  %447 = vmatpush1.msra.mxu0 0.0
  %448 = vmatprep.subr.mxu0 0.0
  %449 = vmatpush1.msra.mxu0 0.0
  %450 = vmatprep.subr.mxu0 0.0
  %451 = vmatpush1.msra.mxu0 0.0
  %452 = vmatprep.subr.mxu0 0.0
  %453 = vmatpush1.msra.mxu0 0.0
  %454 = vmatprep.mubr.f32.mxu0 0.0
  %455 = vmatmul.mubr.f32.gmra.mrb[0].mxu0 %v328
  %v456 = vpop.f32.mrb[0].mxu0
  %v457 = vadd.f32 %v324, %v456
  %v458 = vpop.f32.mrb[0].mxu0
  %459 = vmatprep.mubr.f32.mxu0 0.0
  %460 = vmatmul.mubr.f32.gmra.mrb[0].mxu0 %v331
  %v461 = vpop.f32.mrb[0].mxu0
  %v462 = vadd.f32 %v324, %v461
  %v463 = vpop.f32.mrb[0].mxu0
  %464 = vmatprep.mubr.f32.mxu0 0.0
  %465 = vmatmul.mubr.f32.gmra.mrb[0].mxu0 %v334
  %v466 = vpop.f32.mrb[0].mxu0
  %v467 = vadd.f32 %v324, %v466
  %v468 = vpop.f32.mrb[0].mxu0
  %469 = vmatprep.mubr.f32.mxu0 0.0
  %470 = vmatmul.mubr.f32.gmra.mrb[0].mxu0 %v337
  %v471 = vpop.f32.mrb[0].mxu0
  %v472 = vadd.f32 %v324, %v471
  %v473 = vpop.f32.mrb[0].mxu0
  %474 = vmatprep.mubr.f32.mxu0 0.0
  %475 = vmatmul.mubr.f32.gmra.mrb[0].mxu0 %v340
  %v476 = vpop.f32.mrb[0].mxu0
  %v477 = vadd.f32 %v324, %v476
  %v478 = vpop.f32.mrb[0].mxu0
  %479 = vmatprep.mubr.f32.mxu0 0.0
  %480 = vmatmul.mubr.f32.gmra.mrb[0].mxu0 %v343
  %v481 = vpop.f32.mrb[0].mxu0
  %v482 = vadd.f32 %v324, %v481
  %v483 = vpop.f32.mrb[0].mxu0
  %484 = vmatprep.mubr.f32.mxu0 0.0
  %485 = vmatmul.mubr.f32.gmra.mrb[0].mxu0 %v346
  %v486 = vpop.f32.mrb[0].mxu0
  %v487 = vadd.f32 %v324, %v486
  %v488 = vpop.f32.mrb[0].mxu0
  %489 = vmatprep.mubr.f32.mxu0 0.0
  %490 = vmatmul.mubr.f32.gmra.mrb[0].mxu0 %v349
  %v491 = vpop.f32.mrb[0].mxu0
  %v492 = vadd.f32 %v324, %v491
  %v493 = vpop.f32.mrb[0].mxu0
  %494 = vmatprep.mubr.f32.mxu0 0.0
  %495 = vmatmul.mubr.f32.gmra.mrb[0].mxu0 %v352
  %v496 = vpop.f32.mrb[0].mxu0
  %v497 = vadd.f32 %v324, %v496
  %v498 = vpop.f32.mrb[0].mxu0
  %499 = vmatprep.mubr.f32.mxu0 0.0
  %500 = vmatmul.mubr.f32.gmra.mrb[0].mxu0 %v355
  %v501 = vpop.f32.mrb[0].mxu0
  %v502 = vadd.f32 %v324, %v501
  %v503 = vpop.f32.mrb[0].mxu0
  %504 = vmatprep.mubr.f32.mxu0 0.0
  %505 = vmatmul.mubr.f32.gmra.mrb[0].mxu0 %v358
  %v506 = vpop.f32.mrb[0].mxu0
  %v507 = vadd.f32 %v324, %v506
  %v508 = vpop.f32.mrb[0].mxu0
  %509 = vmatprep.mubr.f32.mxu0 0.0
  %510 = vmatmul.mubr.f32.gmra.mrb[0].mxu0 %v361
  %v511 = vpop.f32.mrb[0].mxu0
  %v512 = vadd.f32 %v324, %v511
  %v513 = vpop.f32.mrb[0].mxu0
  %514 = vmatprep.mubr.f32.mxu0 0.0
  %515 = vmatmul.mubr.f32.gmra.mrb[0].mxu0 %v364
  %v516 = vpop.f32.mrb[0].mxu0
  %v517 = vadd.f32 %v324, %v516
  %v518 = vpop.f32.mrb[0].mxu0
  %519 = vmatprep.mubr.f32.mxu0 0.0
  %520 = vmatmul.mubr.f32.gmra.mrb[0].mxu0 %v367
  %v521 = vpop.f32.mrb[0].mxu0
  %v522 = vadd.f32 %v324, %v521
  %v523 = vpop.f32.mrb[0].mxu0
  %524 = vmatprep.mubr.f32.mxu0 0.0
  %525 = vmatmul.mubr.f32.gmra.mrb[0].mxu0 %v370
  %v526 = vpop.f32.mrb[0].mxu0
  %v527 = vadd.f32 %v324, %v526
  %v528 = vpop.f32.mrb[0].mxu0
  %529 = vmatprep.mubr.f32.mxu0 0.0
  %530 = vmatmul.mubr.f32.gmra.mrb[0].mxu0 %v373
  %v531 = vpop.f32.mrb[0].mxu0
  %v532 = vadd.f32 %v324, %v531
  %v533 = vpop.f32.mrb[0].mxu0
  %534 = vmatprep.mubr.f32.mxu0 0.0
  %535 = vmatmul.mubr.f32.gmra.mrb[0].mxu0 %v376
  %v536 = vpop.f32.mrb[0].mxu0
  %v537 = vadd.f32 %v324, %v536
  %v538 = vpop.f32.mrb[0].mxu0
  %539 = vmatprep.mubr.f32.mxu0 0.0
  %540 = vmatmul.mubr.f32.gmra.mrb[0].mxu0 %v379
  %v541 = vpop.f32.mrb[0].mxu0
  %v542 = vadd.f32 %v324, %v541
  %v543 = vpop.f32.mrb[0].mxu0
  %544 = vmatprep.mubr.f32.mxu0 0.0
  %545 = vmatmul.mubr.f32.gmra.mrb[0].mxu0 %v382
  %v546 = vpop.f32.mrb[0].mxu0
  %v547 = vadd.f32 %v324, %v546
  %v548 = vpop.f32.mrb[0].mxu0
  %549 = vmatprep.mubr.f32.mxu0 0.0
  %550 = vmatmul.mubr.f32.gmra.mrb[0].mxu0 %v385
  %v551 = vpop.f32.mrb[0].mxu0
  %v552 = vadd.f32 %v324, %v551
  %v553 = vpop.f32.mrb[0].mxu0
  %554 = vmatprep.mubr.f32.mxu0 0.0
  %555 = vmatmul.mubr.f32.gmra.mrb[0].mxu0 %v388
  %v556 = vpop.f32.mrb[0].mxu0
  %v557 = vadd.f32 %v324, %v556
  %v558 = vpop.f32.mrb[0].mxu0
  %559 = vdwg.mxu0
  %s560 = smul.u32 0, 162
  %v561 = vlaneseq
  %v562 = vshrl.u32 %v561, 7
  %v563 = vadd.s32 %v562, 8
  %v564 = vadd.s32 %v562, 16
  %v565 = vadd.s32 %v562, 24
  %v566 = vadd.s32 %v562, 32
  %v567 = vadd.s32 %v562, 40
  %v568 = vadd.s32 %v562, 48
  %v569 = vadd.s32 %v562, 56
  %v570 = vadd.s32 %v562, 64
  %v571 = vadd.s32 %v562, 72
  %v572 = vadd.s32 %v562, 80
  %v573 = vadd.s32 %v562, 88
  %v574 = vadd.s32 %v562, 96
  %v575 = vadd.s32 %v562, 104
  %v576 = vadd.s32 %v562, 112
  %v577 = vadd.s32 %v562, 120
  %v578 = vadd.s32 %v562, 128
  %v579 = vadd.s32 %v562, 136
  %v580 = vadd.s32 %v562, 144
  %v581 = vadd.s32 %v562, 152
  %v582 = vadd.s32 %v562, 160
  %v583 = vstv %s560
  %v584 = vadd.s32 %v562, %v583
  %v585 = vadd.s32 %v563, %v583
  %v586 = vadd.s32 %v564, %v583
  %v587 = vadd.s32 %v565, %v583
  %v588 = vadd.s32 %v566, %v583
  %v589 = vadd.s32 %v567, %v583
  %v590 = vadd.s32 %v568, %v583
  %v591 = vadd.s32 %v569, %v583
  %v592 = vadd.s32 %v570, %v583
  %v593 = vadd.s32 %v571, %v583
  %v594 = vadd.s32 %v572, %v583
  %v595 = vadd.s32 %v573, %v583
  %v596 = vadd.s32 %v574, %v583
  %v597 = vadd.s32 %v575, %v583
  %v598 = vadd.s32 %v576, %v583
  %v599 = vadd.s32 %v577, %v583
  %v600 = vadd.s32 %v578, %v583
  %v601 = vadd.s32 %v579, %v583
  %v602 = vadd.s32 %v580, %v583
  %v603 = vadd.s32 %v581, %v583
  %v604 = vadd.s32 %v582, %v583
  %vm605 = vcmp.lt.s32.totalorder %v584, 162
  %vm606 = vcmp.lt.s32.totalorder %v585, 162
  %vm607 = vcmp.lt.s32.totalorder %v586, 162
  %vm608 = vcmp.lt.s32.totalorder %v587, 162
  %vm609 = vcmp.lt.s32.totalorder %v588, 162
  %vm610 = vcmp.lt.s32.totalorder %v589, 162
  %vm611 = vcmp.lt.s32.totalorder %v590, 162
  %vm612 = vcmp.lt.s32.totalorder %v591, 162
  %vm613 = vcmp.lt.s32.totalorder %v592, 162
  %vm614 = vcmp.lt.s32.totalorder %v593, 162
  %vm615 = vcmp.lt.s32.totalorder %v594, 162
  %vm616 = vcmp.lt.s32.totalorder %v595, 162
  %vm617 = vcmp.lt.s32.totalorder %v596, 162
  %vm618 = vcmp.lt.s32.totalorder %v597, 162
  %vm619 = vcmp.lt.s32.totalorder %v598, 162
  %vm620 = vcmp.lt.s32.totalorder %v599, 162
  %vm621 = vcmp.lt.s32.totalorder %v600, 162
  %vm622 = vcmp.lt.s32.totalorder %v601, 162
  %vm623 = vcmp.lt.s32.totalorder %v602, 162
  %vm624 = vcmp.lt.s32.totalorder %v603, 162
  %vm625 = vcmp.lt.s32.totalorder %v604, 162
  %v626 = vsel %vm605, %v457, -inf
  %v627 = vsel %vm606, %v462, -inf
  %v628 = vsel %vm607, %v467, -inf
  %v629 = vsel %vm608, %v472, -inf
  %v630 = vsel %vm609, %v477, -inf
  %v631 = vsel %vm610, %v482, -inf
  %v632 = vsel %vm611, %v487, -inf
  %v633 = vsel %vm612, %v492, -inf
  %v634 = vsel %vm613, %v497, -inf
  %v635 = vsel %vm614, %v502, -inf
  %v636 = vsel %vm615, %v507, -inf
  %v637 = vsel %vm616, %v512, -inf
  %v638 = vsel %vm617, %v517, -inf
  %v639 = vsel %vm618, %v522, -inf
  %v640 = vsel %vm619, %v527, -inf
  %v641 = vsel %vm620, %v532, -inf
  %v642 = vsel %vm621, %v537, -inf
  %v643 = vsel %vm622, %v542, -inf
  %v644 = vsel %vm623, %v547, -inf
  %v645 = vsel %vm624, %v552, -inf
  %v646 = vsel %vm625, %v557, -inf
  %vm647 = vcmask 72704
  %v648 = vsel %vm647, %v626, -inf
  %v649 = vsel %vm647, %v627, -inf
  %v650 = vsel %vm647, %v628, -inf
  %v651 = vsel %vm647, %v629, -inf
  %v652 = vsel %vm647, %v630, -inf
  %v653 = vmax.f32 %v648, %v652
  %v654 = vsel %vm647, %v631, -inf
  %v655 = vmax.f32 %v649, %v654
  %v656 = vsel %vm647, %v632, -inf
  %v657 = vmax.f32 %v650, %v656
  %v658 = vsel %vm647, %v633, -inf
  %v659 = vmax.f32 %v651, %v658
  %v660 = vsel %vm647, %v634, -inf
  %v661 = vmax.f32 %v653, %v660
  %v662 = vsel %vm647, %v635, -inf
  %v663 = vmax.f32 %v655, %v662
  %v664 = vsel %vm647, %v636, -inf
  %v665 = vmax.f32 %v657, %v664
  %v666 = vsel %vm647, %v637, -inf
  %v667 = vmax.f32 %v659, %v666
  %v668 = vsel %vm647, %v638, -inf
  %v669 = vmax.f32 %v661, %v668
  %v670 = vsel %vm647, %v639, -inf
  %v671 = vmax.f32 %v663, %v670
  %v672 = vsel %vm647, %v640, -inf
  %v673 = vmax.f32 %v665, %v672
  %v674 = vsel %vm647, %v641, -inf
  %v675 = vmax.f32 %v667, %v674
  %v676 = vsel %vm647, %v642, -inf
  %v677 = vmax.f32 %v669, %v676
  %v678 = vsel %vm647, %v643, -inf
  %v679 = vmax.f32 %v671, %v678
  %v680 = vsel %vm647, %v644, -inf
  %v681 = vmax.f32 %v673, %v680
  %v682 = vsel %vm647, %v645, -inf
  %v683 = vmax.f32 %v675, %v682
  %vm684 = vcmask 66560
  %v685 = vsel %vm684, %v646, -inf
  %v686 = vmax.f32 %v677, %v685
  %v687 = vmax.f32 %v686, %v679
  %v688 = vmax.f32 %v681, %v683
  %v689 = vmax.f32 %v687, %v688
  %v690 = vrot.slane %v689, 4
  %v691 = vmax.f32 %v689, %v690
  %v692 = vrot.slane %v691, 2
  %v693 = vmax.f32 %v691, %v692
  %v694 = vrot.slane %v693, 1
  %v695 = vmax.f32 %v693, %v694
  %v696 = vsub.f32 %v457, %v695
  %v697 = vsub.f32 %v462, %v695
  %v698 = vsub.f32 %v467, %v695
  %v699 = vsub.f32 %v472, %v695
  %v700 = vsub.f32 %v477, %v695
  %v701 = vsub.f32 %v482, %v695
  %v702 = vsub.f32 %v487, %v695
  %v703 = vsub.f32 %v492, %v695
  %v704 = vsub.f32 %v497, %v695
  %v705 = vsub.f32 %v502, %v695
  %v706 = vsub.f32 %v507, %v695
  %v707 = vsub.f32 %v512, %v695
  %v708 = vsub.f32 %v517, %v695
  %v709 = vsub.f32 %v522, %v695
  %v710 = vsub.f32 %v527, %v695
  %v711 = vsub.f32 %v532, %v695
  %v712 = vsub.f32 %v537, %v695
  %v713 = vsub.f32 %v542, %v695
  %v714 = vsub.f32 %v547, %v695
  %v715 = vsub.f32 %v552, %v695
  %v716 = vsub.f32 %v557, %v695
  %v717 = vmul.f32 %v696, 1.442695
  %v718 = vpow.pop %v717
  %v719 = vmul.f32 %v697, 1.442695
  %v720 = vpow.pop %v719
  %v721 = vmul.f32 %v698, 1.442695
  %v722 = vpow.pop %v721
  %v723 = vmul.f32 %v699, 1.442695
  %v724 = vpow.pop %v723
  %v725 = vmul.f32 %v700, 1.442695
  %v726 = vpow.pop %v725
  %v727 = vmul.f32 %v701, 1.442695
  %v728 = vpow.pop %v727
  %v729 = vmul.f32 %v702, 1.442695
  %v730 = vpow.pop %v729
  %v731 = vmul.f32 %v703, 1.442695
  %v732 = vpow.pop %v731
  %v733 = vmul.f32 %v704, 1.442695
  %v734 = vpow.pop %v733
  %v735 = vmul.f32 %v705, 1.442695
  %v736 = vpow.pop %v735
  %v737 = vmul.f32 %v706, 1.442695
  %v738 = vpow.pop %v737
  %v739 = vmul.f32 %v707, 1.442695
  %v740 = vpow.pop %v739
  %v741 = vmul.f32 %v708, 1.442695
  %v742 = vpow.pop %v741
  %v743 = vmul.f32 %v709, 1.442695
  %v744 = vpow.pop %v743
  %v745 = vmul.f32 %v710, 1.442695
  %v746 = vpow.pop %v745
  %v747 = vmul.f32 %v711, 1.442695
  %v748 = vpow.pop %v747
  %v749 = vmul.f32 %v712, 1.442695
  %v750 = vpow.pop %v749
  %v751 = vmul.f32 %v713, 1.442695
  %v752 = vpow.pop %v751
  %v753 = vmul.f32 %v714, 1.442695
  %v754 = vpow.pop %v753
  %v755 = vmul.f32 %v715, 1.442695
  %v756 = vpow.pop %v755
  %v757 = vmul.f32 %v716, 1.442695
  %v758 = vpow.pop %v757
  %v759 = vsel %vm605, %v718, 0.0
  %v760 = vsel %vm606, %v720, 0.0
  %v761 = vsel %vm607, %v722, 0.0
  %v762 = vsel %vm608, %v724, 0.0
  %v763 = vsel %vm609, %v726, 0.0
  %v764 = vsel %vm610, %v728, 0.0
  %v765 = vsel %vm611, %v730, 0.0
  %v766 = vsel %vm612, %v732, 0.0
  %v767 = vsel %vm613, %v734, 0.0
  %v768 = vsel %vm614, %v736, 0.0
  %v769 = vsel %vm615, %v738, 0.0
  %v770 = vsel %vm616, %v740, 0.0
  %v771 = vsel %vm617, %v742, 0.0
  %v772 = vsel %vm618, %v744, 0.0
  %v773 = vsel %vm619, %v746, 0.0
  %v774 = vsel %vm620, %v748, 0.0
  %v775 = vsel %vm621, %v750, 0.0
  %v776 = vsel %vm622, %v752, 0.0
  %v777 = vsel %vm623, %v754, 0.0
  %v778 = vsel %vm624, %v756, 0.0
  %v779 = vsel %vm625, %v758, 0.0
  %v780 = vld [vmem:[%s5] sm:$0xf]
  %v783 = vunpack.c.l.s4 1983009808
  %v784 = vunpack.c.0.s8 %v783
  %v785 = vlaneseq
  %v786 = vshrl.u32 %v785, 7
  %v787 = vsub.s32 %v784, %v786
  %v788 = vrot.slane %v780, %v787
  %v789 = vcombine.high %v788, %v788
  %vm791 = vcmask 277504
  %v792 = vsel %vm791, %v789, 0
  %v795 = vsel %vm120, %v779, 0
  %797 = vmatprep.subr.mxu0 0.0
  %798 = vmatpush1.msra.mxu0 %v759
  %799 = vmatprep.subr.mxu0 0.0
  %800 = vmatpush1.msra.mxu0 %v760
  %801 = vmatprep.subr.mxu0 0.0
  %802 = vmatpush1.msra.mxu0 %v761
  %803 = vmatprep.subr.mxu0 0.0
  %804 = vmatpush1.msra.mxu0 %v762
  %805 = vmatprep.subr.mxu0 0.0
  %806 = vmatpush1.msra.mxu0 %v763
  %807 = vmatprep.subr.mxu0 0.0
  %808 = vmatpush1.msra.mxu0 %v764
  %809 = vmatprep.subr.mxu0 0.0
  %810 = vmatpush1.msra.mxu0 %v765
  %811 = vmatprep.subr.mxu0 0.0
  %812 = vmatpush1.msra.mxu0 %v766
  %813 = vmatprep.subr.mxu0 0.0
  %814 = vmatpush1.msra.mxu0 %v767
  %815 = vmatprep.subr.mxu0 0.0
  %816 = vmatpush1.msra.mxu0 %v768
  %817 = vmatprep.subr.mxu0 0.0
  %818 = vmatpush1.msra.mxu0 %v769
  %819 = vmatprep.subr.mxu0 0.0
  %820 = vmatpush1.msra.mxu0 %v770
  %821 = vmatprep.subr.mxu0 0.0
  %822 = vmatpush1.msra.mxu0 %v771
  %823 = vmatprep.subr.mxu0 0.0
  %824 = vmatpush1.msra.mxu0 %v772
  %825 = vmatprep.subr.mxu0 0.0
  %826 = vmatpush1.msra.mxu0 %v773
  %827 = vmatprep.subr.mxu0 0.0
  %828 = vmatpush1.msra.mxu0 %v774
  %829 = vmatprep.subr.mxu0 0.0
  %830 = vmatpush1.msra.mxu0 %v775
  %831 = vmatprep.subr.mxu0 0.0
  %832 = vmatpush1.msra.mxu0 %v776
  %833 = vmatprep.subr.mxu0 0.0
  %834 = vmatpush1.msra.mxu0 %v777
  %835 = vmatprep.subr.mxu0 0.0
  %836 = vmatpush1.msra.mxu0 %v778
  %837 = vmatprep.subr.mxu0 0.0
  %838 = vmatpush1.msra.mxu0 %v795
  %839 = vmatprep.subr.mxu0 0.0
  %840 = vmatpush1.msra.mxu0 0.0
  %841 = vmatprep.subr.mxu0 0.0
  %842 = vmatpush1.msra.mxu0 0.0
  %843 = vmatprep.subr.mxu0 0.0
  %844 = vmatpush1.msra.mxu0 0.0
  %845 = vmatprep.subr.mxu0 0.0
  %846 = vmatpush1.msra.mxu0 0.0
  %847 = vmatprep.subr.mxu0 0.0
  %848 = vmatpush1.msra.mxu0 0.0
  %849 = vmatprep.subr.mxu0 0.0
  %850 = vmatpush1.msra.mxu0 0.0
  %851 = vmatprep.subr.mxu0 0.0
  %852 = vmatpush1.msra.mxu0 0.0
  %853 = vmatprep.subr.mxu0 0.0
  %854 = vmatpush1.msra.mxu0 0.0
  %855 = vmatprep.subr.mxu0 0.0
  %856 = vmatpush1.msra.mxu0 0.0
  %857 = vmatprep.subr.mxu0 0.0
  %858 = vmatpush1.msra.mxu0 0.0
  %859 = vmatprep.subr.mxu0 0.0
  %860 = vmatpush1.msra.mxu0 0.0
  %861 = vmatprep.mubr.f32.mxu0 %v792
  %862 = vmatmul.mubr.f32.gmra.mrb[0].mxu0 %v788
  %v863 = vpop.f32.mrb[0].mxu0
  %v864 = vadd.f32 0.0, %v863
  %v865 = vpop.f32.mrb[0].mxu0
  %866 = vdwg.mxu0
  %v867 = vmax.f32 %v864, 1e-30
  %v868 = vld [vmem:[%s6] sm:$0xff]
  %v869 = vld [vmem:[%s6 + $0x8] sm:$0xff]
  %v870 = vld [vmem:[%s6 + $0x10] sm:$0xff]
  %v871 = vld [vmem:[%s6 + $0x18] sm:$0xff]
  %v872 = vld [vmem:[%s6 + $0x20] sm:$0xff]
  %v873 = vld [vmem:[%s6 + $0x28] sm:$0xff]
  %v874 = vld [vmem:[%s6 + $0x30] sm:$0xff]
  %v875 = vld [vmem:[%s6 + $0x38] sm:$0xff]
  %v876 = vld [vmem:[%s6 + $0x40] sm:$0xff]
  %v877 = vld [vmem:[%s6 + $0x48] sm:$0xff]
  %v878 = vld [vmem:[%s6 + $0x50] sm:$0xff]
  %v879 = vld [vmem:[%s6 + $0x58] sm:$0xff]
  %v880 = vld [vmem:[%s6 + $0x60] sm:$0xff]
  %v881 = vld [vmem:[%s6 + $0x68] sm:$0xff]
  %v882 = vld [vmem:[%s6 + $0x70] sm:$0xff]
  %v883 = vld [vmem:[%s6 + $0x78] sm:$0xff]
  %v884 = vld [vmem:[%s6 + $0x80] sm:$0xff]
  %v885 = vld [vmem:[%s6 + $0x88] sm:$0xff]
  %v886 = vld [vmem:[%s6 + $0x90] sm:$0xff]
  %v887 = vld [vmem:[%s6 + $0x98] sm:$0xff]
  %v888 = vld [vmem:[%s6 + $0xa0] sm:$0x3]
  %v889 = vrcp.pop %v867
  %vm890 = vcmask 15360
  %v892 = vsel %vm890, %v868, 0
  %v895 = vsel %vm890, %v869, 0
  %v898 = vsel %vm890, %v870, 0
  %v901 = vsel %vm890, %v871, 0
  %v904 = vsel %vm890, %v872, 0
  %v907 = vsel %vm890, %v873, 0
  %v910 = vsel %vm890, %v874, 0
  %v913 = vsel %vm890, %v875, 0
  %v916 = vsel %vm890, %v876, 0
  %v919 = vsel %vm890, %v877, 0
  %v922 = vsel %vm890, %v878, 0
  %v925 = vsel %vm890, %v879, 0
  %v928 = vsel %vm890, %v880, 0
  %v931 = vsel %vm890, %v881, 0
  %v934 = vsel %vm890, %v882, 0
  %v937 = vsel %vm890, %v883, 0
  %v940 = vsel %vm890, %v884, 0
  %v943 = vsel %vm890, %v885, 0
  %v946 = vsel %vm890, %v886, 0
  %v949 = vsel %vm890, %v887, 0
  %v952 = vsel %vm890, %v888, 0
  %v955 = vsel %vm120, %v889, 0
  %957 = vmatprep.subr.mxu0 0.0
  %958 = vmatpush1.msra.mxu0 %v955
  %959 = vmatprep.subr.mxu0 0.0
  %960 = vmatpush1.msra.mxu0 0.0
  %961 = vmatprep.subr.mxu0 0.0
  %962 = vmatpush1.msra.mxu0 0.0
  %963 = vmatprep.subr.mxu0 0.0
  %964 = vmatpush1.msra.mxu0 0.0
  %965 = vmatprep.subr.mxu0 0.0
  %966 = vmatpush1.msra.mxu0 0.0
  %967 = vmatprep.subr.mxu0 0.0
  %968 = vmatpush1.msra.mxu0 0.0
  %969 = vmatprep.subr.mxu0 0.0
  %970 = vmatpush1.msra.mxu0 0.0
  %971 = vmatprep.subr.mxu0 0.0
  %972 = vmatpush1.msra.mxu0 0.0
  %973 = vmatprep.subr.mxu0 0.0
  %974 = vmatpush1.msra.mxu0 0.0
  %975 = vmatprep.subr.mxu0 0.0
  %976 = vmatpush1.msra.mxu0 0.0
  %977 = vmatprep.subr.mxu0 0.0
  %978 = vmatpush1.msra.mxu0 0.0
  %979 = vmatprep.subr.mxu0 0.0
  %980 = vmatpush1.msra.mxu0 0.0
  %981 = vmatprep.subr.mxu0 0.0
  %982 = vmatpush1.msra.mxu0 0.0
  %983 = vmatprep.subr.mxu0 0.0
  %984 = vmatpush1.msra.mxu0 0.0
  %985 = vmatprep.subr.mxu0 0.0
  %986 = vmatpush1.msra.mxu0 0.0
  %987 = vmatprep.subr.mxu0 0.0
  %988 = vmatpush1.msra.mxu0 0.0
  %989 = vmatprep.subr.mxu0 0.0
  %990 = vmatpush1.msra.mxu0 0.0
  %991 = vmatprep.subr.mxu0 0.0
  %992 = vmatpush1.msra.mxu0 0.0
  %993 = vmatprep.subr.mxu0 0.0
  %994 = vmatpush1.msra.mxu0 0.0
  %995 = vmatprep.subr.mxu0 0.0
  %996 = vmatpush1.msra.mxu0 0.0
  %997 = vmatprep.subr.mxu0 0.0
  %998 = vmatpush1.msra.mxu0 0.0
  %999 = vmatprep.subr.mxu0 0.0
  %1000 = vmatpush1.msra.mxu0 0.0
  %1001 = vmatprep.subr.mxu0 0.0
  %1002 = vmatpush1.msra.mxu0 0.0
  %1003 = vmatprep.subr.mxu0 0.0
  %1004 = vmatpush1.msra.mxu0 0.0
  %1005 = vmatprep.subr.mxu0 0.0
  %1006 = vmatpush1.msra.mxu0 0.0
  %1007 = vmatprep.subr.mxu0 0.0
  %1008 = vmatpush1.msra.mxu0 0.0
  %1009 = vmatprep.subr.mxu0 0.0
  %1010 = vmatpush1.msra.mxu0 0.0
  %1011 = vmatprep.subr.mxu0 0.0
  %1012 = vmatpush1.msra.mxu0 0.0
  %1013 = vmatprep.subr.mxu0 0.0
  %1014 = vmatpush1.msra.mxu0 0.0
  %1015 = vmatprep.subr.mxu0 0.0
  %1016 = vmatpush1.msra.mxu0 0.0
  %1017 = vmatprep.subr.mxu0 0.0
  %1018 = vmatpush1.msra.mxu0 0.0
  %1019 = vmatprep.subr.mxu0 0.0
  %1020 = vmatpush1.msra.mxu0 0.0
  %1021 = vmatprep.mubr.f32.mxu0 0.0
  %1022 = vmatmul.mubr.f32.gmra.mrb[0].mxu0 %v892
  %v1023 = vpop.f32.mrb[0].mxu0
  %v1024 = vadd.f32 0.0, %v1023
  %v1025 = vpop.f32.mrb[0].mxu0
  %1026 = vmatprep.mubr.f32.mxu0 0.0
  %1027 = vmatmul.mubr.f32.gmra.mrb[0].mxu0 %v895
  %v1028 = vpop.f32.mrb[0].mxu0
  %v1029 = vadd.f32 0.0, %v1028
  %v1030 = vpop.f32.mrb[0].mxu0
  %1031 = vmatprep.mubr.f32.mxu0 0.0
  %1032 = vmatmul.mubr.f32.gmra.mrb[0].mxu0 %v898
  %v1033 = vpop.f32.mrb[0].mxu0
  %v1034 = vadd.f32 0.0, %v1033
  %v1035 = vpop.f32.mrb[0].mxu0
  %1036 = vmatprep.mubr.f32.mxu0 0.0
  %1037 = vmatmul.mubr.f32.gmra.mrb[0].mxu0 %v901
  %v1038 = vpop.f32.mrb[0].mxu0
  %v1039 = vadd.f32 0.0, %v1038
  %v1040 = vpop.f32.mrb[0].mxu0
  %1041 = vmatprep.mubr.f32.mxu0 0.0
  %1042 = vmatmul.mubr.f32.gmra.mrb[0].mxu0 %v904
  %v1043 = vpop.f32.mrb[0].mxu0
  %v1044 = vadd.f32 0.0, %v1043
  %v1045 = vpop.f32.mrb[0].mxu0
  %1046 = vmatprep.mubr.f32.mxu0 0.0
  %1047 = vmatmul.mubr.f32.gmra.mrb[0].mxu0 %v907
  %v1048 = vpop.f32.mrb[0].mxu0
  %v1049 = vadd.f32 0.0, %v1048
  %v1050 = vpop.f32.mrb[0].mxu0
  %1051 = vmatprep.mubr.f32.mxu0 0.0
  %1052 = vmatmul.mubr.f32.gmra.mrb[0].mxu0 %v910
  %v1053 = vpop.f32.mrb[0].mxu0
  %v1054 = vadd.f32 0.0, %v1053
  %v1055 = vpop.f32.mrb[0].mxu0
  %1056 = vmatprep.mubr.f32.mxu0 0.0
  %1057 = vmatmul.mubr.f32.gmra.mrb[0].mxu0 %v913
  %v1058 = vpop.f32.mrb[0].mxu0
  %v1059 = vadd.f32 0.0, %v1058
  %v1060 = vpop.f32.mrb[0].mxu0
  %1061 = vmatprep.mubr.f32.mxu0 0.0
  %1062 = vmatmul.mubr.f32.gmra.mrb[0].mxu0 %v916
  %v1063 = vpop.f32.mrb[0].mxu0
  %v1064 = vadd.f32 0.0, %v1063
  %v1065 = vpop.f32.mrb[0].mxu0
  %1066 = vmatprep.mubr.f32.mxu0 0.0
  %1067 = vmatmul.mubr.f32.gmra.mrb[0].mxu0 %v919
  %v1068 = vpop.f32.mrb[0].mxu0
  %v1069 = vadd.f32 0.0, %v1068
  %v1070 = vpop.f32.mrb[0].mxu0
  %1071 = vmatprep.mubr.f32.mxu0 0.0
  %1072 = vmatmul.mubr.f32.gmra.mrb[0].mxu0 %v922
  %v1073 = vpop.f32.mrb[0].mxu0
  %v1074 = vadd.f32 0.0, %v1073
  %v1075 = vpop.f32.mrb[0].mxu0
  %1076 = vmatprep.mubr.f32.mxu0 0.0
  %1077 = vmatmul.mubr.f32.gmra.mrb[0].mxu0 %v925
  %v1078 = vpop.f32.mrb[0].mxu0
  %v1079 = vadd.f32 0.0, %v1078
  %v1080 = vpop.f32.mrb[0].mxu0
  %1081 = vmatprep.mubr.f32.mxu0 0.0
  %1082 = vmatmul.mubr.f32.gmra.mrb[0].mxu0 %v928
  %v1083 = vpop.f32.mrb[0].mxu0
  %v1084 = vadd.f32 0.0, %v1083
  %v1085 = vpop.f32.mrb[0].mxu0
  %1086 = vmatprep.mubr.f32.mxu0 0.0
  %1087 = vmatmul.mubr.f32.gmra.mrb[0].mxu0 %v931
  %v1088 = vpop.f32.mrb[0].mxu0
  %v1089 = vadd.f32 0.0, %v1088
  %v1090 = vpop.f32.mrb[0].mxu0
  %1091 = vmatprep.mubr.f32.mxu0 0.0
  %1092 = vmatmul.mubr.f32.gmra.mrb[0].mxu0 %v934
  %v1093 = vpop.f32.mrb[0].mxu0
  %v1094 = vadd.f32 0.0, %v1093
  %v1095 = vpop.f32.mrb[0].mxu0
  %1096 = vmatprep.mubr.f32.mxu0 0.0
  %1097 = vmatmul.mubr.f32.gmra.mrb[0].mxu0 %v937
  %v1098 = vpop.f32.mrb[0].mxu0
  %v1099 = vadd.f32 0.0, %v1098
  %v1100 = vpop.f32.mrb[0].mxu0
  %1101 = vmatprep.mubr.f32.mxu0 0.0
  %1102 = vmatmul.mubr.f32.gmra.mrb[0].mxu0 %v940
  %v1103 = vpop.f32.mrb[0].mxu0
  %v1104 = vadd.f32 0.0, %v1103
  %v1105 = vpop.f32.mrb[0].mxu0
  %1106 = vmatprep.mubr.f32.mxu0 0.0
  %1107 = vmatmul.mubr.f32.gmra.mrb[0].mxu0 %v943
  %v1108 = vpop.f32.mrb[0].mxu0
  %v1109 = vadd.f32 0.0, %v1108
  %v1110 = vpop.f32.mrb[0].mxu0
  %1111 = vmatprep.mubr.f32.mxu0 0.0
  %1112 = vmatmul.mubr.f32.gmra.mrb[0].mxu0 %v946
  %v1113 = vpop.f32.mrb[0].mxu0
  %v1114 = vadd.f32 0.0, %v1113
  %v1115 = vpop.f32.mrb[0].mxu0
  %1116 = vmatprep.mubr.f32.mxu0 0.0
  %1117 = vmatmul.mubr.f32.gmra.mrb[0].mxu0 %v949
  %v1118 = vpop.f32.mrb[0].mxu0
  %v1119 = vadd.f32 0.0, %v1118
  %v1120 = vpop.f32.mrb[0].mxu0
  %1121 = vmatprep.mubr.f32.mxu0 0.0
  %1122 = vmatmul.mubr.f32.gmra.mrb[0].mxu0 %v952
  %v1123 = vpop.f32.mrb[0].mxu0
  %v1124 = vadd.f32 0.0, %v1123
  %v1125 = vpop.f32.mrb[0].mxu0
  %1126 = vdwg.mxu0
  %v1127 = vmul.f32 %v759, %v1024
  %v1128 = vmul.f32 %v760, %v1029
  %v1129 = vmul.f32 %v761, %v1034
  %v1130 = vmul.f32 %v762, %v1039
  %v1131 = vmul.f32 %v763, %v1044
  %v1132 = vmul.f32 %v764, %v1049
  %v1133 = vmul.f32 %v765, %v1054
  %v1134 = vmul.f32 %v766, %v1059
  %v1135 = vmul.f32 %v767, %v1064
  %v1136 = vmul.f32 %v768, %v1069
  %v1137 = vmul.f32 %v769, %v1074
  %v1138 = vmul.f32 %v770, %v1079
  %v1139 = vmul.f32 %v771, %v1084
  %v1140 = vmul.f32 %v772, %v1089
  %v1141 = vmul.f32 %v773, %v1094
  %v1142 = vmul.f32 %v774, %v1099
  %v1143 = vmul.f32 %v775, %v1104
  %v1144 = vmul.f32 %v776, %v1109
  %v1145 = vmul.f32 %v777, %v1114
  %v1146 = vmul.f32 %v778, %v1119
  %v1147 = vmul.f32 %v779, %v1124
  %1148 = vst.msk [vmem:[%s7] sm:$0xff] %vm647, %v1127
  %1149 = vst.msk [vmem:[%s7 + $0x8] sm:$0xff] %vm647, %v1128
  %1150 = vst.msk [vmem:[%s7 + $0x10] sm:$0xff] %vm647, %v1129
  %1151 = vst.msk [vmem:[%s7 + $0x18] sm:$0xff] %vm647, %v1130
  %1152 = vst.msk [vmem:[%s7 + $0x20] sm:$0xff] %vm647, %v1131
  %1153 = vst.msk [vmem:[%s7 + $0x28] sm:$0xff] %vm647, %v1132
  %1154 = vst.msk [vmem:[%s7 + $0x30] sm:$0xff] %vm647, %v1133
  %1155 = vst.msk [vmem:[%s7 + $0x38] sm:$0xff] %vm647, %v1134
  %1156 = vst.msk [vmem:[%s7 + $0x40] sm:$0xff] %vm647, %v1135
  %1157 = vst.msk [vmem:[%s7 + $0x48] sm:$0xff] %vm647, %v1136
  %1158 = vst.msk [vmem:[%s7 + $0x50] sm:$0xff] %vm647, %v1137
  %1159 = vst.msk [vmem:[%s7 + $0x58] sm:$0xff] %vm647, %v1138
  %1160 = vst.msk [vmem:[%s7 + $0x60] sm:$0xff] %vm647, %v1139
  %1161 = vst.msk [vmem:[%s7 + $0x68] sm:$0xff] %vm647, %v1140
  %1162 = vst.msk [vmem:[%s7 + $0x70] sm:$0xff] %vm647, %v1141
  %1163 = vst.msk [vmem:[%s7 + $0x78] sm:$0xff] %vm647, %v1142
  %1164 = vst.msk [vmem:[%s7 + $0x80] sm:$0xff] %vm647, %v1143
  %1165 = vst.msk [vmem:[%s7 + $0x88] sm:$0xff] %vm647, %v1144
  %1166 = vst.msk [vmem:[%s7 + $0x90] sm:$0xff] %vm647, %v1145
  %1167 = vst.msk [vmem:[%s7 + $0x98] sm:$0xff] %vm647, %v1146
  %1168 = vst.msk [vmem:[%s7 + $0xa0] sm:$0x3] %vm684, %v1147
  // Predicated region
  $region30: #{tpu_custom_call.1} parent=0 // pred_check
    _
  $region31: #{tpu_custom_call.1} parent=0 // pred_check_branch
    %1170 = sbr.rel (0) target = $region33
  $region32: #{tpu_custom_call.1} parent=0 // pred_region
    _
  $region33: #{tpu_custom_call.1} parent=0 // pred_fallthru
    _
  // Predicated region
  $region34: #{tpu_custom_call.1} parent=0 // pred_check
    _
  $region35: #{tpu_custom_call.1} parent=0 // pred_check_branch
    %1172 = sbr.rel (0) target = $region37
  $region36: #{tpu_custom_call.1} parent=0 // pred_region
    _
  $region37: #{tpu_custom_call.1} parent=0 // pred_fallthru
    _

</llo_original>
